<compile_context>
chip_gen: v6e
topology: v6e:2x2x1
jax: 0.10.0
libtpu: 0.0.40
codegen_flags: <defaults>
</compile_context>

<pallas_src>
import functools

import jax
import jax.numpy as jnp
from jax.experimental import pallas as pl
from jax.experimental.pallas import tpu as pltpu


def _focal_loss_kernel(cls_ref, x_ref, t_ref, at_ref, o_ref, *, gamma, n_rows):
    """One batch tile: (TILE_N, C) logits -> one scalar partial sum."""
    x = x_ref[...]                       # (TILE_N, C) native dtype (f32/bf16)
    xf = x.astype(jnp.float32)           # f32 math
    t = t_ref[...]                       # (TILE_N, 1) i32 targets
    cls_row = cls_ref[...]               # (1, C)      i32 resident class ids
    alpha_t = at_ref[...]                # (TILE_N, 1) f32 alpha[targets]

    tile_n = x.shape[0]

    # Target mask from the resident class-id row (no per-step slab iota).
    mask = cls_row == t                                          # (TILE_N, C)

    # Stable softmax pieces; one exp per slab element.
    m = jnp.max(xf, axis=-1, keepdims=True)                      # (TILE_N, 1)
    e = jnp.exp(xf - m)                                          # (TILE_N, C)
    denom = jnp.sum(e, axis=-1, keepdims=True)                   # (TILE_N, 1)

    # x[target] via a single masked reduce (select, not cast+mul+sum).
    x_t = jnp.max(jnp.where(mask, xf, -jnp.inf),
                  axis=-1, keepdims=True)                        # (TILE_N, 1)

    # ce = logsumexp(x) - x[target]; pt = softmax(x)[target] = exp(x_t-m)/denom.
    ce = jnp.log(denom) + (m - x_t)                              # (TILE_N, 1)
    pt = jnp.exp(x_t - m) / denom      # column-only exp; exact divide

    # (1 - pt) ** gamma : integer gamma -> repeated multiplies; clamp >= 0.
    u = jnp.maximum(1.0 - pt, 0.0)
    if float(gamma) == float(int(gamma)) and 0 <= int(gamma) <= 8:
        w = jnp.ones_like(u)
        for _ in range(int(gamma)):
            w = w * u
    else:
        w = u ** gamma

    focal = alpha_t * w * ce                                     # (TILE_N, 1)

    ragged = (n_rows % tile_n) != 0      # static Python bool

    if not ragged:
        o_ref[...] = jnp.broadcast_to(jnp.sum(focal), o_ref.shape)
    else:
        last = pl.num_programs(0) - 1

        @pl.when(pl.program_id(0) != last)
        def _():
            o_ref[...] = jnp.broadcast_to(jnp.sum(focal), o_ref.shape)

        @pl.when(pl.program_id(0) == last)
        def _():
            row_ids = (pl.program_id(0) * tile_n
                       + jax.lax.broadcasted_iota(jnp.int32, (tile_n, 1), 0))
            masked = jnp.where(row_ids < n_rows, focal, 0.0)
            o_ref[...] = jnp.broadcast_to(jnp.sum(masked), o_ref.shape)


def focal_loss(inputs, targets, alpha, gamma=2.0):
    """inputs: (N, C) float logits, targets: (N,) int labels, alpha: (C,).

    Note: out-of-range targets give ce = +inf (no matching class) instead of
    raising like PyTorch; callers must pass valid labels.
    """
    n, c = inputs.shape

    # Keep the dominant (N, C) stream in its native dtype when f32/bf16;
    # upcast happens in-kernel.  Other dtypes fall back to an f32 cast.
    if inputs.dtype not in (jnp.float32, jnp.bfloat16):
        inputs = inputs.astype(jnp.float32)
    x = inputs
    dtype_bytes = jnp.dtype(x.dtype).itemsize
    row_align = 8 if dtype_bytes == 4 else 16     # sublane packing (f32 / bf16)

    t = targets.astype(jnp.int32).reshape(n, 1)
    # Gather alpha[targets] once in the wrapper (N-length) instead of a
    # full-width alpha * one_hot reduce inside the kernel.
    alpha_t = alpha.astype(jnp.float32)[targets.astype(jnp.int32)].reshape(n, 1)
    cls_row = jax.lax.broadcasted_iota(jnp.int32, (1, c), 1)

    # Tile sizing: ~4 MiB of logits per tile (double-buffered ~8 MiB), safe on
    # v5e/v6e/v7x once vmem_limit_bytes is raised; >= 2 tiles when possible so
    # the "parallel" grid axis shards across both TensorCores on v7x.
    c_lanes = ((c + 127) // 128) * 128
    target_tile_bytes = 4 * 1024 * 1024
    max_rows = max(row_align,
                   (target_tile_bytes // (c_lanes * dtype_bytes))
                   // row_align * row_align)
    n_aligned = ((n + row_align - 1) // row_align) * row_align
    tile_n = max(row_align, min(max_rows, 4096, n_aligned))
    if (-(-n // tile_n)) < 2 and tile_n >= 2 * row_align:
        half = -(-n // 2)
        tile_n = max(row_align, ((half + row_align - 1) // row_align) * row_align)
    num_tiles = -(-n // tile_n)

    vmem_need = (2 * tile_n * c_lanes * dtype_bytes        # double-buffered logits
                 + 2 * tile_n * 4 * 2                      # targets + alpha_t
                 + c_lanes * 4                             # class-id row
                 + 2 * 8 * 128 * 4 + (1 << 20))            # out blocks + headroom
    vmem_limit = int(min(100 * 1024 * 1024, max(32 * 1024 * 1024, vmem_need)))

    kernel = functools.partial(_focal_loss_kernel, gamma=float(gamma), n_rows=n)

    cost = pl.CostEstimate(
        flops=5 * n * c,
        transcendentals=n * c,
        bytes_accessed=dtype_bytes * n * c
        + 4 * (2 * n + c + num_tiles * 8 * 128),
    )

    partials = pl.pallas_call(
        kernel,
        out_shape=jax.ShapeDtypeStruct((num_tiles, 8, 128), jnp.float32),
        grid=(num_tiles,),
        in_specs=[
            pl.BlockSpec((1, c), lambda i: (0, 0)),        # class ids (resident)
            pl.BlockSpec((tile_n, c), lambda i: (i, 0)),   # logits, native dtype
            pl.BlockSpec((tile_n, 1), lambda i: (i, 0)),   # targets
            pl.BlockSpec((tile_n, 1), lambda i: (i, 0)),   # alpha[targets]
        ],
        out_specs=pl.BlockSpec((1, 8, 128), lambda i: (i, 0, 0)),
        compiler_params=pltpu.CompilerParams(
            dimension_semantics=("parallel",),
            vmem_limit_bytes=vmem_limit),
        cost_estimate=cost,
    )(cls_row, x, t, alpha_t)

    # Tiny finalize in JAX: one partial per tile, reduction='mean'.
    return jnp.sum(partials[:, 0, 0]) / jnp.float32(n)


def _focal_loss_ref(inputs, targets, alpha, gamma=2.0):
    # Pure-JAX reference mirroring the PyTorch module (reduction='mean').
    logp = jax.nn.log_softmax(inputs.astype(jnp.float32), axis=-1)
    ce = -jnp.take_along_axis(logp, targets[:, None].astype(jnp.int32),
                              axis=-1)[:, 0]
    pt = jnp.exp(-ce)
    focal = alpha[targets] * (1.0 - pt) ** gamma * ce
    return jnp.mean(focal)


if __name__ == "__main__":
    key = jax.random.PRNGKey(0)
    k1, k2 = jax.random.split(key)

    batch = 8
    num_classes = 100

    inputs = jax.random.normal(k1, (batch, num_classes), dtype=jnp.float32)
    targets = jax.random.randint(k2, (batch,), 0, num_classes, dtype=jnp.int32)
    # FocalLoss.__init__ with alpha=None -> torch.ones(num_classes)
    alpha = jnp.ones((num_classes,), dtype=jnp.float32)

    loss = focal_loss(inputs, targets, alpha, gamma=2.0)
    loss = jax.block_until_ready(loss)

    ref = _focal_loss_ref(inputs, targets, alpha, gamma=2.0)
    assert jnp.allclose(loss, ref, rtol=1e-4, atol=1e-4), (loss, ref)

    print("KERNEL_OK")
</pallas_src>

<mosaic_0001>
module attributes {stable_mosaic.version = 11 : i64} {
  func.func @_focal_loss_kernel(%arg0: i32, %arg1: memref<1x100xi32, #tpu.memory_space<vmem>>, %arg2: memref<8x100xf32, #tpu.memory_space<vmem>>, %arg3: memref<8x1xi32, #tpu.memory_space<vmem>>, %arg4: memref<8x1xf32, #tpu.memory_space<vmem>>, %arg5: memref<1x8x128xf32, #tpu.memory_space<vmem>>) attributes {dimension_semantics = [#tpu.dimension_semantics<parallel>], iteration_bounds = array<i64: 1>, scalar_prefetch = 0 : i64, scratch_operands = 0 : i64, tpu.core_type = #tpu.core_type<tc>, window_params = [{pipeline_mode = #tpu.pipeline_mode<synchronous>, transform_indices = @transform_0, window_bounds = array<i64: 1, 100>}, {transform_indices = @transform_1, window_bounds = array<i64: 8, 100>}, {transform_indices = @transform_2, window_bounds = array<i64: 8, 1>}, {transform_indices = @transform_3, window_bounds = array<i64: 8, 1>}, {transform_indices = @transform_4, window_bounds = array<i64: 1, 8, 128>}]} {
    %c0 = arith.constant 0 : index
    %c0_0 = arith.constant 0 : index
    %0 = vector.load %arg2[%c0, %c0_0] : memref<8x100xf32, #tpu.memory_space<vmem>>, vector<8x100xf32>
    %c0_1 = arith.constant 0 : index
    %c0_2 = arith.constant 0 : index
    %1 = vector.load %arg3[%c0_1, %c0_2] : memref<8x1xi32, #tpu.memory_space<vmem>>, vector<8x1xi32>
    %c0_3 = arith.constant 0 : index
    %c0_4 = arith.constant 0 : index
    %2 = vector.load %arg1[%c0_3, %c0_4] : memref<1x100xi32, #tpu.memory_space<vmem>>, vector<1x100xi32>
    %c0_5 = arith.constant 0 : index
    %c0_6 = arith.constant 0 : index
    %3 = vector.load %arg4[%c0_5, %c0_6] : memref<8x1xf32, #tpu.memory_space<vmem>>, vector<8x1xf32>
    %4 = vector.broadcast %2 : vector<1x100xi32> to vector<8x100xi32>
    %5 = vector.broadcast %1 : vector<8x1xi32> to vector<8x100xi32>
    %6 = arith.cmpi eq, %4, %5 : vector<8x100xi32>
    %cst = arith.constant dense<0xFF800000> : vector<8xf32>
    %7 = vector.multi_reduction <maximumf>, %0, %cst [1] : vector<8x100xf32> to vector<8xf32>
    %8 = vector.shape_cast %7 : vector<8xf32> to vector<8x1xf32>
    %9 = vector.broadcast %8 : vector<8x1xf32> to vector<8x100xf32>
    %10 = arith.subf %0, %9 : vector<8x100xf32>
    %11 = math.exp %10 : vector<8x100xf32>
    %cst_7 = arith.constant dense<0.000000e+00> : vector<8xf32>
    %12 = vector.multi_reduction <add>, %11, %cst_7 [1] : vector<8x100xf32> to vector<8xf32>
    %13 = vector.shape_cast %12 : vector<8xf32> to vector<8x1xf32>
    %cst_8 = arith.constant 0xFF800000 : f32
    %14 = vector.broadcast %cst_8 : f32 to vector<8x100xf32>
    %15 = arith.select %6, %0, %14 : vector<8x100xi1>, vector<8x100xf32>
    %cst_9 = arith.constant dense<0xFF800000> : vector<8xf32>
    %16 = vector.multi_reduction <maximumf>, %15, %cst_9 [1] : vector<8x100xf32> to vector<8xf32>
    %17 = vector.shape_cast %16 : vector<8xf32> to vector<8x1xf32>
    %18 = math.log %13 : vector<8x1xf32>
    %19 = arith.subf %8, %17 : vector<8x1xf32>
    %20 = arith.addf %18, %19 : vector<8x1xf32>
    %21 = arith.subf %17, %8 : vector<8x1xf32>
    %22 = math.exp %21 : vector<8x1xf32>
    %23 = arith.divf %22, %13 : vector<8x1xf32>
    %cst_10 = arith.constant 1.000000e+00 : f32
    %24 = vector.broadcast %cst_10 : f32 to vector<8x1xf32>
    %25 = arith.subf %24, %23 : vector<8x1xf32>
    %cst_11 = arith.constant 0.000000e+00 : f32
    %26 = vector.broadcast %cst_11 : f32 to vector<8x1xf32>
    %27 = arith.maximumf %25, %26 : vector<8x1xf32>
    %cst_12 = arith.constant 1.000000e+00 : f32
    %28 = vector.broadcast %cst_12 : f32 to vector<8x1xf32>
    %29 = arith.mulf %28, %27 : vector<8x1xf32>
    %30 = arith.mulf %29, %27 : vector<8x1xf32>
    %31 = arith.mulf %3, %30 : vector<8x1xf32>
    %32 = arith.mulf %31, %20 : vector<8x1xf32>
    %33 = vector.shape_cast %32 : vector<8x1xf32> to vector<1x8x1xf32>
    %cst_13 = arith.constant dense<0.000000e+00> : vector<1xf32>
    %34 = vector.multi_reduction <add>, %33, %cst_13 [1, 2] : vector<1x8x1xf32> to vector<1xf32>
    %35 = vector.shape_cast %34 : vector<1xf32> to vector<1x1x1xf32>
    %36 = vector.extract %35[0, 0, 0] : f32 from vector<1x1x1xf32>
    %37 = vector.broadcast %36 : f32 to vector<1x8x128xf32>
    %c0_14 = arith.constant 0 : index
    %c0_15 = arith.constant 0 : index
    %c0_16 = arith.constant 0 : index
    %38 = vector.load %arg5[%c0_14, %c0_15, %c0_16] : memref<1x8x128xf32, #tpu.memory_space<vmem>>, vector<1x8x128xf32>
    tpu.vector_store %arg5[%c0_14, %c0_15, %c0_16], %37 {strides = array<i32>} : memref<1x8x128xf32, #tpu.memory_space<vmem>>, vector<1x8x128xf32>,
    return
  }
  func.func @transform_0(%arg0: i32) -> (i32, i32) {
    %c0_i32 = arith.constant 0 : i32
    %c0_i32_0 = arith.constant 0 : i32
    %c0_i32_1 = arith.constant 0 : i32
    return %c0_i32, %c0_i32_0 : i32, i32
  }
  func.func @transform_1(%arg0: i32) -> (i32, i32) {
    %c0_i32 = arith.constant 0 : i32
    %c0_i32_0 = arith.constant 0 : i32
    return %arg0, %c0_i32 : i32, i32
  }
  func.func @transform_2(%arg0: i32) -> (i32, i32) {
    %c0_i32 = arith.constant 0 : i32
    %c0_i32_0 = arith.constant 0 : i32
    return %arg0, %c0_i32 : i32, i32
  }
  func.func @transform_3(%arg0: i32) -> (i32, i32) {
    %c0_i32 = arith.constant 0 : i32
    %c0_i32_0 = arith.constant 0 : i32
    return %arg0, %c0_i32 : i32, i32
  }
  func.func @transform_4(%arg0: i32) -> (i32, i32, i32) {
    %c0_i32 = arith.constant 0 : i32
    %c0_i32_0 = arith.constant 0 : i32
    %c0_i32_1 = arith.constant 0 : i32
    return %arg0, %c0_i32, %c0_i32_0 : i32, i32, i32
  }
}

</mosaic_0001>

<llo_original>
// kernel: tpu_custom_call.1
$region0: #{tpu_custom_call.1}
  #allocation0 [shape = 'u32[]', space=smem, size = 0x4, offset = 0x4, fixed_abs, tag = 'smem constant byte address 0x4 - core index']
  #allocation1 [shape = 'u32[144,128]{1,0:T(1,128)}', space=vmem, size = 0x12000, scoped, tag = 'internal scratch']
  %s0 = inlined_call_operand.vmem [shape: s32[1,100], index: 0, kind: input, shape index: {}]
  %s1 = inlined_call_operand.vmem [shape: f32[8,100], index: 1, kind: input, shape index: {}]
  %s2 = inlined_call_operand.vmem [shape: s32[8,1], index: 2, kind: input, shape index: {}]
  %s3 = inlined_call_operand.vmem [shape: f32[8,1], index: 3, kind: input, shape index: {}]
  %s4 = inlined_call_operand.hbm [shape: f32[1,8,128], index: 4, kind: output, shape index: {}]
  %s5 = sld [smem:[#allocation0]]
  $region26: #{tpu_custom_call.1} parent=0
    _
  %s7 = ssub.s32 1, %s5
  %s8 = scalar_select 0, %s7, %s5
  $region1: #{tpu_custom_call.1} parent=0
    #allocation2 [shape = 'u8[4096]{0}', space=vmem, size = 0x1000, scoped, tag = 'output window, operand 0, single buffered']
    #allocation3 [shape = 's32[1]{0}', space=sflag, size = 0x4, scoped, tag = 'scoped memory for tpu_custom_call.1']
    %9 = vsyncpa [#allocation3], 0
    // Predicated region
    $region2: #{tpu_custom_call.1} parent=1 // pred_check
      _
    $region3: #{tpu_custom_call.1} parent=1 // pred_check_branch
      %11 = sbr.rel (0) target = $region5
    $region4: #{tpu_custom_call.1} parent=1 // pred_region
      _
    $region5: #{tpu_custom_call.1} parent=1 // pred_fallthru
      _
    // Predicated region
    $region6: #{tpu_custom_call.1} parent=1 // pred_check
      _
    $region7: #{tpu_custom_call.1} parent=1 // pred_check_branch
      %13 = sbr.rel (0) target = $region9
    $region8: #{tpu_custom_call.1} parent=1 // pred_region
      _
    $region9: #{tpu_custom_call.1} parent=1 // pred_fallthru
      _
    // Predicated region
    $region10: #{tpu_custom_call.1} parent=1 // pred_check
      _
    $region11: #{tpu_custom_call.1} parent=1 // pred_check_branch
      %15 = sbr.rel (0) target = $region13
    $region12: #{tpu_custom_call.1} parent=1 // pred_region
      _
    $region13: #{tpu_custom_call.1} parent=1 // pred_fallthru
      _
    // Predicated region
    $region14: #{tpu_custom_call.1} parent=1 // pred_check
      _
    $region15: #{tpu_custom_call.1} parent=1 // pred_check_branch
      %17 = sbr.rel (0) target = $region17
    $region16: #{tpu_custom_call.1} parent=1 // pred_region
      _
    $region17: #{tpu_custom_call.1} parent=1 // pred_fallthru
      _
    %v18 = vld [vmem:[%s1] sm:$0xff]
    %v19 = vld [vmem:[%s2] sm:$0xff]
    %v20 = vld [vmem:[%s0] sm:$0x1]
    %v21 = vld [vmem:[%s3] sm:$0xff]
    %v22 = vlaneseq
    %v23 = vshrl.u32 %v22, 7
    %v24 = vsub.s32 0, %v23
    %v25 = vrot.slane %v20, %v24
    %26 = vset.pattern.permute.xlu0 0
    %27 = vperm.xlu0 %26, %v19
    %v28 = vpop.permute.xlu0 %27
    %vm29 = vcmp.eq.s32.totalorder %v25, %v28
    %vm30 = vcmask 818176
    %v31 = vsel %vm30, %v18, -inf
    %32 = vmax.xlane.f32.xlu0 %v31
    %v33 = vpop.xlane.xlu0 %32
    %v34 = vsub.f32 %v18, %v33
    %v35 = vmul.f32 %v34, 1.442695
    %v36 = vpow.pop %v35
    %v37 = vsel %vm30, %v36, 0.0
    %38 = vadd.xlane.f32.xlu0 %v37
    %v39 = vpop.xlane.xlu0 %38
    %v40 = vsel %vm29, %v18, -inf
    %v41 = vsel %vm30, %v40, -inf
    %42 = vmax.xlane.f32.xlu0 %v41
    %v43 = vpop.xlane.xlu0 %42
    %v44 = vlog2.pop %v39
    %v45 = vmul.f32 %v44, 0.6931472
    %v46 = vsub.f32 %v33, %v43
    %v47 = vadd.f32 %v45, %v46
    %v48 = vsub.f32 %v43, %v33
    %v49 = vmul.f32 %v48, 1.442695
    %v50 = vpow.pop %v49
    %v51 = vrcp.pop %v39
    %v52 = vmul.f32 %v50, %v51
    %v53 = vsub.f32 1.0, %v52
    %v54 = vmax.f32 %v53, 0.0
    %v55 = vmul.f32 %v54, %v54
    %v56 = vmul.f32 %v21, %v55
    %v57 = vmul.f32 %v56, %v47
    %vm58 = vcmask 7168
    %v59 = vsel %vm58, %v57, 0.0
    %60 = vadd.xlane.f32.xlu0 %v59
    %v61 = vpop.xlane.xlu0 %60
    %v62 = vrot.slane %v61, 4
    %v63 = vadd.f32 %v61, %v62
    %v64 = vrot.slane %v63, 2
    %v65 = vadd.f32 %v63, %v64
    %v66 = vrot.slane %v65, 1
    %v67 = vadd.f32 %v65, %v66
    %s68 = vtos %v67
    %v69 = vstv %s68
    %70 = vst [vmem:[#allocation2] sm:$0xff] %v69
    // Predicated region
    $region18: #{tpu_custom_call.1} parent=1 // pred_check
      _
    $region19: #{tpu_custom_call.1} parent=1 // pred_check_branch
      %72 = sbr.rel (0) target = $region21
    $region20: #{tpu_custom_call.1} parent=1 // pred_region
      %s74 = ssub.s32 128, 128
      %75 = vsyncadd [#allocation3], %s74
      %s77 = sshll.u32 [#allocation2], 4
      %s78 = int_to_ptr.vmem [resolvable:$true] %s77
      %80 = dma.vmem_to_hbm [thread:$0]  %s78, 128, %s4, [#allocation3]
    $region21: #{tpu_custom_call.1} parent=1 // pred_fallthru
      _
    // Predicated region
    $region22: #{tpu_custom_call.1} parent=1 // pred_check
      _
    $region23: #{tpu_custom_call.1} parent=1 // pred_check_branch
      %82 = sbr.rel (0) target = $region25
    $region24: #{tpu_custom_call.1} parent=1 // pred_region
      %83 = dma.done [#allocation3], 128
    $region25: #{tpu_custom_call.1} parent=1 // pred_fallthru
      _
    %84 = vsyncpa [#allocation3], 1

</llo_original>
